<compile_context>
chip_gen: v7x
topology: tpu7x:2x2x1
jax: 0.10.0
libtpu: 0.0.40
codegen_flags: <defaults>
</compile_context>

<pallas_src>
import jax
import jax.numpy as jnp
from jax.experimental import pallas as pl
from jax.experimental.pallas import tpu as pltpu


def _round_up(x: int, m: int) -> int:
    return ((x + m - 1) // m) * m


def caf_dynamics_kernel(ssum_ref, posT_ref, w1T_ref, bias_ref, w2T_ref,
                        b2_ref, s_ref, posdotT_ref, negtrT_ref):
    posT = posT_ref[...]                      # [D, TN]  (lane-dense in N)
    w1T = w1T_ref[...]                        # [H, D]
    d_dim = posT.shape[0]                     # static (e.g. 3)

    # pre[h, n] = sum_d W1[d, h] * pos[n, d] + bias[h]
    # D is tiny -> unrolled VPU broadcast-FMAs instead of a K=D MXU matmul.
    acc = w1T[:, 0:1] * posT[0:1, :]          # [H, TN]
    for d in range(1, d_dim):
        acc = acc + w1T[:, d:d + 1] * posT[d:d + 1, :]
    h = jnp.tanh(acc + bias_ref[...])         # [H, TN]   (EUP)

    # pos_dot^T = W2^T @ h + b2^T : [D, TN]  (MXU, N on output lanes)
    posdotT_ref[...] = (jnp.dot(w2T_ref[...], h,
                                preferred_element_type=jnp.float32)
                        + b2_ref[...]).astype(posdotT_ref.dtype)

    # -trJ = sum_j s_j * h_j^2 - sum_j s_j   : [1, TN]
    quad = jnp.sum(s_ref[...] * (h * h), axis=0, keepdims=True)
    negtrT_ref[...] = (quad - ssum_ref[...]).astype(negtrT_ref.dtype)


def caf_dynamics(t, pos, c, params, *, tile_n=1024):
    """Pallas implementation of CAFDynamics.forward (estimate_trace=False).

    Args:
      t:   scalar float time.
      pos: [N, D] positions.
      c:   [1, C] conditioning vector (broadcast over points).
      params: dict with W1 [D,H], b1 [1,H], wt [1,H], Wc [C,H], W2 [H,D],
              b2 [1,D].
    Returns:
      (pos_dot [N, D], neg_trJ [N, 1])
    """
    W1, b1, wt, Wc, W2, b2 = (params["W1"], params["b1"], params["wt"],
                              params["Wc"], params["W2"], params["b2"])
    N, D = pos.shape
    H = W1.shape[1]
    f32 = jnp.float32

    W1f = W1.astype(f32)
    W2f = W2.astype(f32)

    # Pos-independent hidden bias, computed once in the wrapper: [H, 1].
    bias_col = (c.astype(f32) @ Wc.astype(f32)
                + jnp.asarray(t, f32) * wt.astype(f32)
                + b1.astype(f32)).T

    # Exact-trace contraction vector and its sum (f32).
    s = jnp.sum(W1f.T * W2f, axis=-1)              # [H]
    s_col = s[:, None]                             # [H, 1]
    s_sum = jnp.sum(s)[None, None]                 # [1, 1]

    w1T = W1f.T                                    # [H, D]
    w2T = W2f.T                                    # [D, H]
    b2_col = b2.astype(f32).T                      # [D, 1]

    # Feature-major, lane-dense layout: N on the lane axis, padded to the tile.
    tn = min(tile_n, _round_up(N, 128))
    n_pad = _round_up(N, tn)
    posT = jnp.zeros((D, n_pad), f32).at[:, :N].set(pos.T.astype(f32))

    grid = (n_pad // tn,)
    const = lambda i: (0, 0)                       # VMEM-resident params
    tile = lambda i: (0, i)                        # stream over N tiles

    flops = n_pad * (4 * D * H + 3 * H)
    bytes_accessed = (n_pad * (2 * D + 1) * 4
                      + 4 * (2 * D * H + 3 * H + D + 1))

    posdotT, negtrT = pl.pallas_call(
        caf_dynamics_kernel,
        out_shape=(
            jax.ShapeDtypeStruct((D, n_pad), pos.dtype),
            jax.ShapeDtypeStruct((1, n_pad), f32),
        ),
        grid=grid,
        in_specs=[
            pl.BlockSpec((1, 1), const),           # sum(s)
            pl.BlockSpec((D, tn), tile),           # pos^T tile
            pl.BlockSpec((H, D), const),           # W1^T
            pl.BlockSpec((H, 1), const),           # hoisted bias
            pl.BlockSpec((D, H), const),           # W2^T
            pl.BlockSpec((D, 1), const),           # b2^T
            pl.BlockSpec((H, 1), const),           # s
        ],
        out_specs=(
            pl.BlockSpec((D, tn), tile),
            pl.BlockSpec((1, tn), tile),
        ),
        compiler_params=pltpu.CompilerParams(
            dimension_semantics=("parallel",)),
        cost_estimate=pl.CostEstimate(
            flops=int(flops),
            transcendentals=int(n_pad * H),
            bytes_accessed=int(bytes_accessed)),
    )(s_sum, posT, w1T, bias_col, w2T, b2_col, s_col)

    pos_dot = posdotT[:, :N].T.astype(pos.dtype)   # [N, D]
    neg_trj = negtrT[:, :N].T                      # [N, 1]
    return pos_dot, neg_trj


def _reference(t, pos, c, params):
    """Pure-JAX reference: fdyn forward + exact per-point Jacobian trace."""
    W1, b1, wt, Wc, W2, b2 = (params["W1"], params["b1"], params["wt"],
                              params["Wc"], params["W2"], params["b2"])

    def fdyn_point(x):                                   # x: [D]
        h = jnp.tanh(x @ W1 + (c @ Wc)[0] + t * wt[0] + b1[0])
        return h @ W2 + b2[0]                            # [D]

    pos_dot = jax.vmap(fdyn_point)(pos)
    jac = jax.vmap(jax.jacrev(fdyn_point))(pos)          # [N, D, D]
    trj = jnp.trace(jac, axis1=-2, axis2=-1)[:, None]    # [N, 1]
    return pos_dot, -trj


if __name__ == "__main__":
    # points, ambient dim, hidden, context dim (N chosen to exercise the grid
    # and the lane padding: 640 -> 3 tiles of 256 with 128 padded lanes).
    N, D, H, C = 640, 3, 32, 8

    key = jax.random.PRNGKey(0)
    k_pos, k_c, k_w1, k_wt, k_wc, k_w2, k_b1, k_b2 = jax.random.split(key, 8)

    pos = jax.random.normal(k_pos, (N, D), dtype=jnp.float32)
    c = jax.random.normal(k_c, (1, C), dtype=jnp.float32)
    t = 0.37

    params = {
        "W1": jax.random.normal(k_w1, (D, H), dtype=jnp.float32) * 0.5,
        "b1": jax.random.normal(k_b1, (1, H), dtype=jnp.float32) * 0.1,
        "wt": jax.random.normal(k_wt, (1, H), dtype=jnp.float32) * 0.1,
        "Wc": jax.random.normal(k_wc, (C, H), dtype=jnp.float32) * 0.1,
        "W2": jax.random.normal(k_w2, (H, D), dtype=jnp.float32) * 0.5,
        "b2": jax.random.normal(k_b2, (1, D), dtype=jnp.float32) * 0.1,
    }

    pos_dot, neg_trj = caf_dynamics(t, pos, c, params, tile_n=256)
    jax.block_until_ready((pos_dot, neg_trj))

    ref_pos_dot, ref_neg_trj = _reference(t, pos, c, params)
    assert pos_dot.shape == (N, D) and neg_trj.shape == (N, 1)
    assert jnp.allclose(pos_dot, ref_pos_dot, atol=1e-4, rtol=1e-4)
    assert jnp.allclose(neg_trj, ref_neg_trj, atol=1e-4, rtol=1e-4)

    print("KERNEL_OK")
</pallas_src>

<mosaic_0001>
module attributes {stable_mosaic.version = 11 : i64} {
  func.func @caf_dynamics_kernel(%arg0: i32, %arg1: memref<1x1xf32, #tpu.memory_space<vmem>>, %arg2: memref<3x256xf32, #tpu.memory_space<vmem>>, %arg3: memref<32x3xf32, #tpu.memory_space<vmem>>, %arg4: memref<32x1xf32, #tpu.memory_space<vmem>>, %arg5: memref<3x32xf32, #tpu.memory_space<vmem>>, %arg6: memref<3x1xf32, #tpu.memory_space<vmem>>, %arg7: memref<32x1xf32, #tpu.memory_space<vmem>>, %arg8: memref<3x256xf32, #tpu.memory_space<vmem>>, %arg9: memref<1x256xf32, #tpu.memory_space<vmem>>) attributes {dimension_semantics = [#tpu.dimension_semantics<parallel>], iteration_bounds = array<i64: 3>, scalar_prefetch = 0 : i64, scratch_operands = 0 : i64, tpu.core_type = #tpu.core_type<tc>, window_params = [{pipeline_mode = #tpu.pipeline_mode<synchronous>, transform_indices = @transform_0, window_bounds = array<i64: 1, 1>}, {transform_indices = @transform_1, window_bounds = array<i64: 3, 256>}, {pipeline_mode = #tpu.pipeline_mode<synchronous>, transform_indices = @transform_2, window_bounds = array<i64: 32, 3>}, {pipeline_mode = #tpu.pipeline_mode<synchronous>, transform_indices = @transform_3, window_bounds = array<i64: 32, 1>}, {pipeline_mode = #tpu.pipeline_mode<synchronous>, transform_indices = @transform_4, window_bounds = array<i64: 3, 32>}, {pipeline_mode = #tpu.pipeline_mode<synchronous>, transform_indices = @transform_5, window_bounds = array<i64: 3, 1>}, {pipeline_mode = #tpu.pipeline_mode<synchronous>, transform_indices = @transform_6, window_bounds = array<i64: 32, 1>}, {transform_indices = @transform_7, window_bounds = array<i64: 3, 256>}, {transform_indices = @transform_8, window_bounds = array<i64: 1, 256>}]} {
    %c0 = arith.constant 0 : index
    %c0_0 = arith.constant 0 : index
    %0 = vector.load %arg2[%c0, %c0_0] : memref<3x256xf32, #tpu.memory_space<vmem>>, vector<3x256xf32>
    %c0_1 = arith.constant 0 : index
    %c0_2 = arith.constant 0 : index
    %1 = vector.load %arg3[%c0_1, %c0_2] : memref<32x3xf32, #tpu.memory_space<vmem>>, vector<32x3xf32>
    %2 = vector.extract_strided_slice %1 {offsets = [0, 0], sizes = [32, 1], strides = [1, 1]} : vector<32x3xf32> to vector<32x1xf32>
    %3 = vector.extract_strided_slice %0 {offsets = [0, 0], sizes = [1, 256], strides = [1, 1]} : vector<3x256xf32> to vector<1x256xf32>
    %4 = vector.broadcast %2 : vector<32x1xf32> to vector<32x256xf32>
    %5 = vector.broadcast %3 : vector<1x256xf32> to vector<32x256xf32>
    %6 = arith.mulf %4, %5 : vector<32x256xf32>
    %7 = vector.extract_strided_slice %1 {offsets = [0, 1], sizes = [32, 1], strides = [1, 1]} : vector<32x3xf32> to vector<32x1xf32>
    %8 = vector.extract_strided_slice %0 {offsets = [1, 0], sizes = [1, 256], strides = [1, 1]} : vector<3x256xf32> to vector<1x256xf32>
    %9 = vector.broadcast %7 : vector<32x1xf32> to vector<32x256xf32>
    %10 = vector.broadcast %8 : vector<1x256xf32> to vector<32x256xf32>
    %11 = arith.mulf %9, %10 : vector<32x256xf32>
    %12 = arith.addf %6, %11 : vector<32x256xf32>
    %13 = vector.extract_strided_slice %1 {offsets = [0, 2], sizes = [32, 1], strides = [1, 1]} : vector<32x3xf32> to vector<32x1xf32>
    %14 = vector.extract_strided_slice %0 {offsets = [2, 0], sizes = [1, 256], strides = [1, 1]} : vector<3x256xf32> to vector<1x256xf32>
    %15 = vector.broadcast %13 : vector<32x1xf32> to vector<32x256xf32>
    %16 = vector.broadcast %14 : vector<1x256xf32> to vector<32x256xf32>
    %17 = arith.mulf %15, %16 : vector<32x256xf32>
    %18 = arith.addf %12, %17 : vector<32x256xf32>
    %c0_3 = arith.constant 0 : index
    %c0_4 = arith.constant 0 : index
    %19 = vector.load %arg4[%c0_3, %c0_4] : memref<32x1xf32, #tpu.memory_space<vmem>>, vector<32x1xf32>
    %20 = vector.broadcast %19 : vector<32x1xf32> to vector<32x256xf32>
    %21 = arith.addf %18, %20 : vector<32x256xf32>
    %22 = math.tanh %21 : vector<32x256xf32>
    %c0_5 = arith.constant 0 : index
    %c0_6 = arith.constant 0 : index
    %23 = vector.load %arg5[%c0_5, %c0_6] : memref<3x32xf32, #tpu.memory_space<vmem>>, vector<3x32xf32>
    %cst = arith.constant dense<0.000000e+00> : vector<3x256xf32>
    %24 = tpu.matmul %23, %22, %cst {dimension_numbers = #tpu.dot_dimension_numbers<[1], [0], [0], [1], [0, 0, 1, 1], [], []>} : vector<3x32xf32>, vector<32x256xf32>, vector<3x256xf32> -> vector<3x256xf32>
    %c0_7 = arith.constant 0 : index
    %c0_8 = arith.constant 0 : index
    %25 = vector.load %arg6[%c0_7, %c0_8] : memref<3x1xf32, #tpu.memory_space<vmem>>, vector<3x1xf32>
    %26 = vector.broadcast %25 : vector<3x1xf32> to vector<3x256xf32>
    %27 = arith.addf %24, %26 : vector<3x256xf32>
    %c0_9 = arith.constant 0 : index
    %c0_10 = arith.constant 0 : index
    %28 = vector.load %arg8[%c0_9, %c0_10] : memref<3x256xf32, #tpu.memory_space<vmem>>, vector<3x256xf32>
    tpu.vector_store %arg8[%c0_9, %c0_10], %27 {strides = array<i32>} : memref<3x256xf32, #tpu.memory_space<vmem>>, vector<3x256xf32>,
    %c0_11 = arith.constant 0 : index
    %c0_12 = arith.constant 0 : index
    %29 = vector.load %arg7[%c0_11, %c0_12] : memref<32x1xf32, #tpu.memory_space<vmem>>, vector<32x1xf32>
    %30 = arith.mulf %22, %22 : vector<32x256xf32>
    %31 = vector.broadcast %29 : vector<32x1xf32> to vector<32x256xf32>
    %32 = arith.mulf %31, %30 : vector<32x256xf32>
    %cst_13 = arith.constant dense<0.000000e+00> : vector<256xf32>
    %33 = vector.multi_reduction <add>, %32, %cst_13 [0] : vector<32x256xf32> to vector<256xf32>
    %34 = vector.shape_cast %33 : vector<256xf32> to vector<1x256xf32>
    %c0_14 = arith.constant 0 : index
    %c0_15 = arith.constant 0 : index
    %35 = vector.load %arg1[%c0_14, %c0_15] : memref<1x1xf32, #tpu.memory_space<vmem>>, vector<1x1xf32>
    %36 = vector.broadcast %35 : vector<1x1xf32> to vector<1x256xf32>
    %37 = arith.subf %34, %36 : vector<1x256xf32>
    %c0_16 = arith.constant 0 : index
    %c0_17 = arith.constant 0 : index
    %38 = vector.load %arg9[%c0_16, %c0_17] : memref<1x256xf32, #tpu.memory_space<vmem>>, vector<1x256xf32>
    tpu.vector_store %arg9[%c0_16, %c0_17], %37 {strides = array<i32>} : memref<1x256xf32, #tpu.memory_space<vmem>>, vector<1x256xf32>,
    return
  }
  func.func @transform_0(%arg0: i32) -> (i32, i32) {
    %c0_i32 = arith.constant 0 : i32
    %c0_i32_0 = arith.constant 0 : i32
    %c0_i32_1 = arith.constant 0 : i32
    return %c0_i32, %c0_i32_0 : i32, i32
  }
  func.func @transform_1(%arg0: i32) -> (i32, i32) {
    %c0_i32 = arith.constant 0 : i32
    %c0_i32_0 = arith.constant 0 : i32
    return %c0_i32, %arg0 : i32, i32
  }
  func.func @transform_2(%arg0: i32) -> (i32, i32) {
    %c0_i32 = arith.constant 0 : i32
    %c0_i32_0 = arith.constant 0 : i32
    %c0_i32_1 = arith.constant 0 : i32
    return %c0_i32, %c0_i32_0 : i32, i32
  }
  func.func @transform_3(%arg0: i32) -> (i32, i32) {
    %c0_i32 = arith.constant 0 : i32
    %c0_i32_0 = arith.constant 0 : i32
    %c0_i32_1 = arith.constant 0 : i32
    return %c0_i32, %c0_i32_0 : i32, i32
  }
  func.func @transform_4(%arg0: i32) -> (i32, i32) {
    %c0_i32 = arith.constant 0 : i32
    %c0_i32_0 = arith.constant 0 : i32
    %c0_i32_1 = arith.constant 0 : i32
    return %c0_i32, %c0_i32_0 : i32, i32
  }
  func.func @transform_5(%arg0: i32) -> (i32, i32) {
    %c0_i32 = arith.constant 0 : i32
    %c0_i32_0 = arith.constant 0 : i32
    %c0_i32_1 = arith.constant 0 : i32
    return %c0_i32, %c0_i32_0 : i32, i32
  }
  func.func @transform_6(%arg0: i32) -> (i32, i32) {
    %c0_i32 = arith.constant 0 : i32
    %c0_i32_0 = arith.constant 0 : i32
    %c0_i32_1 = arith.constant 0 : i32
    return %c0_i32, %c0_i32_0 : i32, i32
  }
  func.func @transform_7(%arg0: i32) -> (i32, i32) {
    %c0_i32 = arith.constant 0 : i32
    %c0_i32_0 = arith.constant 0 : i32
    return %c0_i32, %arg0 : i32, i32
  }
  func.func @transform_8(%arg0: i32) -> (i32, i32) {
    %c0_i32 = arith.constant 0 : i32
    %c0_i32_0 = arith.constant 0 : i32
    return %c0_i32, %arg0 : i32, i32
  }
}

</mosaic_0001>

<llo_original>
// kernel: tpu_custom_call.1
$region0: #{tpu_custom_call.1}
  #allocation0 [shape = 'u32[]', space=smem, size = 0x4, offset = 0x4, fixed_abs, tag = 'smem constant byte address 0x4 - core index']
  #allocation1 [shape = 'u32[144,128]{1,0:T(1,128)}', space=vmem, size = 0x12000, scoped, tag = 'internal scratch']
  #allocation2 [shape = 'f32[1,1]{1,0:T(1,128)S(1)}', space=vmem, size = 0x200, scoped, tag = 'scoped memory for tpu_custom_call.1']
  %s0 = inlined_call_operand.<no memory space> [shape: f32[1,1], index: 0, kind: input, shape index: {}]
  %s1 = inlined_call_operand.vmem [shape: f32[3,768], index: 1, kind: input, shape index: {}]
  %s2 = inlined_call_operand.vmem [shape: f32[32,3], index: 2, kind: input, shape index: {}]
  %s3 = inlined_call_operand.vmem [shape: f32[32,1], index: 3, kind: input, shape index: {}]
  %s4 = inlined_call_operand.vmem [shape: f32[3,32], index: 4, kind: input, shape index: {}]
  %s5 = inlined_call_operand.vmem [shape: f32[3,1], index: 5, kind: input, shape index: {}]
  %s6 = inlined_call_operand.vmem [shape: f32[32,1], index: 6, kind: input, shape index: {}]
  %s7 = inlined_call_operand.hbm [shape: f32[3,768], index: 7, kind: output, shape index: {0}]
  %s8 = inlined_call_operand.hbm [shape: f32[1,768], index: 8, kind: output, shape index: {1}]
  %9 = xla_tuple %s7, %s8
  %s10 = sld [smem:[#allocation0]]
  $region69: #{tpu_custom_call.1} parent=0
    _
  %s12 = ssub.s32 1, %s10
  %s13 = scalar_select 0, %s12, %s10
  %v14 = vstv %s0
  %15 = vst [vmem:[#allocation2] sm:$0x1] %v14
  $region1: #{tpu_custom_call.1} parent=0
    #allocation3 [shape = 'u8[8192]{0}', space=vmem, size = 0x2000, scoped, tag = 'output window, operand 0']
    #allocation4 [shape = 's32[2]{0}', space=sflag, size = 0x8, scoped, tag = 'scoped memory for tpu_custom_call.1']
    #allocation5 [shape = 'u8[2048]{0}', space=vmem, size = 0x800, scoped, tag = 'output window, operand 1']
    #allocation6 [shape = 's32[2]{0}', space=sflag, size = 0x8, scoped, tag = 'scoped memory for tpu_custom_call.1']
    %16 = vsyncpa [#allocation4], 0
    %s17 = scalar_lea.sflag [#allocation4], 1
    %18 = vsyncpa %s17, 0
    %19 = vsyncpa [#allocation6], 0
    %s20 = scalar_lea.sflag [#allocation6], 1
    %21 = vsyncpa %s20, 0
    loop: start=0, step=1, limit=5
    $region2: #{tpu_custom_call.1} parent=1 // loop_pre_header
      _
    $region3: #{tpu_custom_call.1} parent=1 // loop_header
      %s23 = sphi 0, %s27
      %p24 = scmp.ge.s32.totalorder %s23, 5
      %s31 = sphi 0, %s31
      %s33 = sphi 0, %s31
      %s34 = sphi 0, %s33
      %s48 = sphi 0, %s34
      %s54 = sphi 0, %s56
      %s57 = sphi 0, %s54
      %s58 = sphi 0, %s57
      %s74 = sphi 0, %s58
      %s78 = sphi 0, %s78
      %s80 = sphi 0, %s78
      %s81 = sphi 0, %s80
      %s95 = sphi 0, %s81
      %s99 = sphi 0, %s99
      %s101 = sphi 0, %s99
      %s102 = sphi 0, %s101
      %s116 = sphi 0, %s102
      %s120 = sphi 0, %s120
      %s122 = sphi 0, %s120
      %s123 = sphi 0, %s122
      %s137 = sphi 0, %s123
      %s141 = sphi 0, %s141
      %s143 = sphi 0, %s141
      %s144 = sphi 0, %s143
      %s158 = sphi 0, %s144
      %s162 = sphi 0, %s162
      %s164 = sphi 0, %s162
      %s165 = sphi 0, %s164
      %s179 = sphi 0, %s165
      %s185 = sphi 0, %s187
      %s188 = sphi 0, %s185
      %s189 = sphi 0, %s188
      %s205 = sphi 0, %s189
      %s211 = sphi 0, %s213
      %s214 = sphi 0, %s211
      %s215 = sphi 0, %s214
      %s231 = sphi 0, %s215
    $region4: #{tpu_custom_call.1} parent=1 // loop_header_branch
      %26 = sbr.rel (%p24) target = $region8
    $region5: #{tpu_custom_call.1} parent=1 // loop_body
      %s28 = ssub.s32 %s23, 1
      %s29 = ssub.s32 %s23, 2
      %s30 = sadd.s32 %s23, 1
      %s32 = sadd.s32 %s31, 1
      %p35 = scmp.eq.s32.totalorder %s23, 2
      %p36 = scmp.ne.s32.totalorder %s31, %s33
      %p37 = scmp.eq.s32.totalorder %s23, 0
      %p38 = por %p36, %p37
      %p39 = scmp.ne.s32.totalorder %s31, %s33
      %p40 = scmp.eq.s32.totalorder %s28, 2
      %p41 = por %p39, %p40
      %p42 = scmp.ne.s32.totalorder %s33, %s34
      %p43 = scmp.eq.s32.totalorder %s28, 0
      %p44 = por %p42, %p43
      %p45 = scmp.ne.s32.totalorder %s33, %s34
      %p46 = scmp.eq.s32.totalorder %s29, 2
      %p47 = por %p45, %p46
      %p49 = scmp.ne.s32.totalorder %s34, %s48
      %p50 = scmp.eq.s32.totalorder %s29, 0
      %p51 = por %p49, %p50
      %s52 = ssub.s32 %s23, %s30
      %p53 = scmp.eq.s32.totalorder %s52, 0
      %s55 = sadd.s32 %s54, 1
      %s56 = scalar_select %p53, %s54, %s55
      %p59 = pneg %p53
      %p60 = scmp.eq.s32.totalorder %s23, 2
      %p61 = por %p59, %p60
      %p62 = scmp.ne.s32.totalorder %s54, %s57
      %p63 = scmp.eq.s32.totalorder %s23, 0
      %p64 = por %p62, %p63
      %p65 = scmp.ne.s32.totalorder %s54, %s57
      %p66 = scmp.eq.s32.totalorder %s28, 2
      %p67 = por %p65, %p66
      %p68 = scmp.ne.s32.totalorder %s57, %s58
      %p69 = scmp.eq.s32.totalorder %s28, 0
      %p70 = por %p68, %p69
      %p71 = scmp.ne.s32.totalorder %s57, %s58
      %p72 = scmp.eq.s32.totalorder %s29, 2
      %p73 = por %p71, %p72
      %p75 = scmp.ne.s32.totalorder %s58, %s74
      %p76 = scmp.eq.s32.totalorder %s29, 0
      %p77 = por %p75, %p76
      %s79 = sadd.s32 %s78, 1
      %p82 = scmp.eq.s32.totalorder %s23, 2
      %p83 = scmp.ne.s32.totalorder %s78, %s80
      %p84 = scmp.eq.s32.totalorder %s23, 0
      %p85 = por %p83, %p84
      %p86 = scmp.ne.s32.totalorder %s78, %s80
      %p87 = scmp.eq.s32.totalorder %s28, 2
      %p88 = por %p86, %p87
      %p89 = scmp.ne.s32.totalorder %s80, %s81
      %p90 = scmp.eq.s32.totalorder %s28, 0
      %p91 = por %p89, %p90
      %p92 = scmp.ne.s32.totalorder %s80, %s81
      %p93 = scmp.eq.s32.totalorder %s29, 2
      %p94 = por %p92, %p93
      %p96 = scmp.ne.s32.totalorder %s81, %s95
      %p97 = scmp.eq.s32.totalorder %s29, 0
      %p98 = por %p96, %p97
      %s100 = sadd.s32 %s99, 1
      %p103 = scmp.eq.s32.totalorder %s23, 2
      %p104 = scmp.ne.s32.totalorder %s99, %s101
      %p105 = scmp.eq.s32.totalorder %s23, 0
      %p106 = por %p104, %p105
      %p107 = scmp.ne.s32.totalorder %s99, %s101
      %p108 = scmp.eq.s32.totalorder %s28, 2
      %p109 = por %p107, %p108
      %p110 = scmp.ne.s32.totalorder %s101, %s102
      %p111 = scmp.eq.s32.totalorder %s28, 0
      %p112 = por %p110, %p111
      %p113 = scmp.ne.s32.totalorder %s101, %s102
      %p114 = scmp.eq.s32.totalorder %s29, 2
      %p115 = por %p113, %p114
      %p117 = scmp.ne.s32.totalorder %s102, %s116
      %p118 = scmp.eq.s32.totalorder %s29, 0
      %p119 = por %p117, %p118
      %s121 = sadd.s32 %s120, 1
      %p124 = scmp.eq.s32.totalorder %s23, 2
      %p125 = scmp.ne.s32.totalorder %s120, %s122
      %p126 = scmp.eq.s32.totalorder %s23, 0
      %p127 = por %p125, %p126
      %p128 = scmp.ne.s32.totalorder %s120, %s122
      %p129 = scmp.eq.s32.totalorder %s28, 2
      %p130 = por %p128, %p129
      %p131 = scmp.ne.s32.totalorder %s122, %s123
      %p132 = scmp.eq.s32.totalorder %s28, 0
      %p133 = por %p131, %p132
      %p134 = scmp.ne.s32.totalorder %s122, %s123
      %p135 = scmp.eq.s32.totalorder %s29, 2
      %p136 = por %p134, %p135
      %p138 = scmp.ne.s32.totalorder %s123, %s137
      %p139 = scmp.eq.s32.totalorder %s29, 0
      %p140 = por %p138, %p139
      %s142 = sadd.s32 %s141, 1
      %p145 = scmp.eq.s32.totalorder %s23, 2
      %p146 = scmp.ne.s32.totalorder %s141, %s143
      %p147 = scmp.eq.s32.totalorder %s23, 0
      %p148 = por %p146, %p147
      %p149 = scmp.ne.s32.totalorder %s141, %s143
      %p150 = scmp.eq.s32.totalorder %s28, 2
      %p151 = por %p149, %p150
      %p152 = scmp.ne.s32.totalorder %s143, %s144
      %p153 = scmp.eq.s32.totalorder %s28, 0
      %p154 = por %p152, %p153
      %p155 = scmp.ne.s32.totalorder %s143, %s144
      %p156 = scmp.eq.s32.totalorder %s29, 2
      %p157 = por %p155, %p156
      %p159 = scmp.ne.s32.totalorder %s144, %s158
      %p160 = scmp.eq.s32.totalorder %s29, 0
      %p161 = por %p159, %p160
      %s163 = sadd.s32 %s162, 1
      %p166 = scmp.eq.s32.totalorder %s23, 2
      %p167 = scmp.ne.s32.totalorder %s162, %s164
      %p168 = scmp.eq.s32.totalorder %s23, 0
      %p169 = por %p167, %p168
      %p170 = scmp.ne.s32.totalorder %s162, %s164
      %p171 = scmp.eq.s32.totalorder %s28, 2
      %p172 = por %p170, %p171
      %p173 = scmp.ne.s32.totalorder %s164, %s165
      %p174 = scmp.eq.s32.totalorder %s28, 0
      %p175 = por %p173, %p174
      %p176 = scmp.ne.s32.totalorder %s164, %s165
      %p177 = scmp.eq.s32.totalorder %s29, 2
      %p178 = por %p176, %p177
      %p180 = scmp.ne.s32.totalorder %s165, %s179
      %p181 = scmp.eq.s32.totalorder %s29, 0
      %p182 = por %p180, %p181
      %s183 = ssub.s32 %s23, %s30
      %p184 = scmp.eq.s32.totalorder %s183, 0
      %s186 = sadd.s32 %s185, 1
      %s187 = scalar_select %p184, %s185, %s186
      %p190 = pneg %p184
      %p191 = scmp.eq.s32.totalorder %s23, 2
      %p192 = por %p190, %p191
      %p193 = scmp.ne.s32.totalorder %s185, %s188
      %p194 = scmp.eq.s32.totalorder %s23, 0
      %p195 = por %p193, %p194
      %p196 = scmp.ne.s32.totalorder %s185, %s188
      %p197 = scmp.eq.s32.totalorder %s28, 2
      %p198 = por %p196, %p197
      %p199 = scmp.ne.s32.totalorder %s188, %s189
      %p200 = scmp.eq.s32.totalorder %s28, 0
      %p201 = por %p199, %p200
      %p202 = scmp.ne.s32.totalorder %s188, %s189
      %p203 = scmp.eq.s32.totalorder %s29, 2
      %p204 = por %p202, %p203
      %p206 = scmp.ne.s32.totalorder %s189, %s205
      %p207 = scmp.eq.s32.totalorder %s29, 0
      %p208 = por %p206, %p207
      %s209 = ssub.s32 %s23, %s30
      %p210 = scmp.eq.s32.totalorder %s209, 0
      %s212 = sadd.s32 %s211, 1
      %s213 = scalar_select %p210, %s211, %s212
      %p216 = pneg %p210
      %p217 = scmp.eq.s32.totalorder %s23, 2
      %p218 = por %p216, %p217
      %p219 = scmp.ne.s32.totalorder %s211, %s214
      %p220 = scmp.eq.s32.totalorder %s23, 0
      %p221 = por %p219, %p220
      %p222 = scmp.ne.s32.totalorder %s211, %s214
      %p223 = scmp.eq.s32.totalorder %s28, 2
      %p224 = por %p222, %p223
      %p225 = scmp.ne.s32.totalorder %s214, %s215
      %p226 = scmp.eq.s32.totalorder %s28, 0
      %p227 = por %p225, %p226
      %p228 = scmp.ne.s32.totalorder %s214, %s215
      %p229 = scmp.eq.s32.totalorder %s29, 2
      %p230 = por %p228, %p229
      %p232 = scmp.ne.s32.totalorder %s215, %s231
      %p233 = scmp.eq.s32.totalorder %s29, 0
      %p234 = por %p232, %p233
      %p235 = scmp.le.s32.totalorder 1, %s23
      %p236 = scmp.lt.s32.totalorder %s23, 4
      %p237 = pnand %p235, %p236
      %p238 = pneg %p237
      // Predicated region
      $region9: #{tpu_custom_call.1} parent=5 // pred_check
        _
      $region10: #{tpu_custom_call.1} parent=5 // pred_check_branch
        %240 = sbr.rel (%p237) target = $region12
      $region11: #{tpu_custom_call.1} parent=5 // pred_region
        %s241 = ssub.s32 %s23, 1
        // Predicated region
        $region13: #{tpu_custom_call.1} parent=11 // pred_check
          %p242 = pneg %p44
        $region14: #{tpu_custom_call.1} parent=11 // pred_check_branch
          %244 = sbr.rel (%p242) target = $region16
        $region15: #{tpu_custom_call.1} parent=11 // pred_region
          _
        $region16: #{tpu_custom_call.1} parent=11 // pred_fallthru
          _
        // Predicated region
        $region17: #{tpu_custom_call.1} parent=11 // pred_check
          %p245 = pneg %p91
        $region18: #{tpu_custom_call.1} parent=11 // pred_check_branch
          %247 = sbr.rel (%p245) target = $region20
        $region19: #{tpu_custom_call.1} parent=11 // pred_region
          _
        $region20: #{tpu_custom_call.1} parent=11 // pred_fallthru
          _
        // Predicated region
        $region21: #{tpu_custom_call.1} parent=11 // pred_check
          %p248 = pneg %p112
        $region22: #{tpu_custom_call.1} parent=11 // pred_check_branch
          %250 = sbr.rel (%p248) target = $region24
        $region23: #{tpu_custom_call.1} parent=11 // pred_region
          _
        $region24: #{tpu_custom_call.1} parent=11 // pred_fallthru
          _
        // Predicated region
        $region25: #{tpu_custom_call.1} parent=11 // pred_check
          %p251 = pneg %p133
        $region26: #{tpu_custom_call.1} parent=11 // pred_check_branch
          %253 = sbr.rel (%p251) target = $region28
        $region27: #{tpu_custom_call.1} parent=11 // pred_region
          _
        $region28: #{tpu_custom_call.1} parent=11 // pred_fallthru
          _
        // Predicated region
        $region29: #{tpu_custom_call.1} parent=11 // pred_check
          %p254 = pneg %p154
        $region30: #{tpu_custom_call.1} parent=11 // pred_check_branch
          %256 = sbr.rel (%p254) target = $region32
        $region31: #{tpu_custom_call.1} parent=11 // pred_region
          _
        $region32: #{tpu_custom_call.1} parent=11 // pred_fallthru
          _
        // Predicated region
        $region33: #{tpu_custom_call.1} parent=11 // pred_check
          %p257 = pneg %p175
        $region34: #{tpu_custom_call.1} parent=11 // pred_check_branch
          %259 = sbr.rel (%p257) target = $region36
        $region35: #{tpu_custom_call.1} parent=11 // pred_region
          _
        $region36: #{tpu_custom_call.1} parent=11 // pred_fallthru
          _
      $region12: #{tpu_custom_call.1} parent=5 // pred_fallthru
        _
      %p260 = scmp.lt.s32.totalorder %s23, 3
      // Predicated region
      $region37: #{tpu_custom_call.1} parent=5 // pred_check
        %p261 = pneg %p260
      $region38: #{tpu_custom_call.1} parent=5 // pred_check_branch
        %263 = sbr.rel (%p261) target = $region40
      $region39: #{tpu_custom_call.1} parent=5 // pred_region
        // Predicated region
        $region41: #{tpu_custom_call.1} parent=39 // pred_check
          %p264 = pneg %p64
        $region42: #{tpu_custom_call.1} parent=39 // pred_check_branch
          %266 = sbr.rel (%p264) target = $region44
        $region43: #{tpu_custom_call.1} parent=39 // pred_region
          %s267 = smul.u32 2, %s23
          %p268 = scmp.lt.s32.totalorder %s267, 5
          %s269 = scalar_select %p268, %s267, 5
          %s270 = smul.addr %s269, 4
          %s271 = scalar_lea.vmem %s1, %s270
          %s272 = smul.u32 2, %s23
        $region44: #{tpu_custom_call.1} parent=39 // pred_fallthru
          _
      $region40: #{tpu_custom_call.1} parent=5 // pred_fallthru
        _
      %p273 = scmp.le.s32.totalorder 1, %s23
      %p274 = scmp.lt.s32.totalorder %s23, 4
      %p275 = pnand %p273, %p274
      %p276 = pneg %p275
      // Predicated region
      $region45: #{tpu_custom_call.1} parent=5 // pred_check
        _
      $region46: #{tpu_custom_call.1} parent=5 // pred_check_branch
        %278 = sbr.rel (%p275) target = $region48
      $region47: #{tpu_custom_call.1} parent=5 // pred_region
        %s279 = ssub.s32 %s23, 1
        %p280 = pneg %p44
        %p281 = pneg %p41
        %s282 = smul.u32 2, %s28
        %p283 = scmp.lt.s32.totalorder %s282, 5
        %s284 = scalar_select %p283, %s282, 5
        %s285 = smul.addr %s284, 4
        %s286 = scalar_lea.vmem %s1, %s285
        %p287 = pneg %p70
        %p288 = pneg %p67
        %p289 = pneg %p91
        %p290 = pneg %p88
        %p291 = pneg %p112
        %p292 = pneg %p109
        %p293 = pneg %p133
        %p294 = pneg %p130
        %p295 = pneg %p154
        %p296 = pneg %p151
        %p297 = pneg %p175
        %p298 = pneg %p172
        %p299 = pneg %p201
        %p300 = pneg %p198
        %s301 = sand.u32 %s188, 1
        %s302 = scalar_lea.sflag [#allocation4], %s301
        %s303 = sand.u32 %s188, 1
        %s304 = smul.addr %s303, 8
        %s305 = scalar_lea.vmem [#allocation3], %s304
        %p306 = pneg %p227
        %p307 = pneg %p224
        %s308 = sand.u32 %s214, 1
        %s309 = scalar_lea.sflag [#allocation6], %s308
        %s310 = sand.u32 %s214, 1
        %s311 = smul.addr %s310, 2
        %s312 = scalar_lea.vmem [#allocation5], %s311
        %s313 = smul.u32 2, %s28
        %p314 = scmp.lt.s32.totalorder %s313, 5
        %s315 = scalar_select %p314, %s313, 5
        %s316 = smul.addr %s315, 4
        %s317 = scalar_lea.vmem %s1, %s316
        %s318 = smul.u32 2, %s28
        %s319 = smul.u32 2, %s28
        %s320 = smul.u32 2, %s28
        %v321 = vld [vmem:[%s317] sm:$0x77]
        %v322 = vld [vmem:[%s2] sm:$0xff]
        %v323 = vld [vmem:[%s2 + $0x8] sm:$0xff]
        %v324 = vld [vmem:[%s2 + $0x10] sm:$0xff]
        %v325 = vld [vmem:[%s2 + $0x18] sm:$0xff]
        %327 = vset.pattern.permute.xlu0 0
        %328 = vperm.xlu0 %327, %v322
        %v329 = vpop.permute.xlu0 %328
        %332 = vset.pattern.permute.xlu0 0
        %333 = vperm.xlu0 %332, %v323
        %v334 = vpop.permute.xlu0 %333
        %337 = vset.pattern.permute.xlu0 0
        %338 = vperm.xlu0 %337, %v324
        %v339 = vpop.permute.xlu0 %338
        %342 = vset.pattern.permute.xlu0 0
        %343 = vperm.xlu0 %342, %v325
        %v344 = vpop.permute.xlu0 %343
        %v347 = vlaneseq
        %v348 = vshrl.u32 %v347, 7
        %v349 = vsub.s32 0, %v348
        %v350 = vrot.slane %v321, %v349
        %v351 = vlaneseq
        %v352 = vshrl.u32 %v351, 7
        %v353 = vsub.s32 4, %v352
        %v354 = vrot.slane %v321, %v353
        %v357 = vlaneseq
        %v358 = vshrl.u32 %v357, 7
        %v359 = vsub.s32 0, %v358
        %v360 = vrot.slane %v350, %v359
        %v361 = vlaneseq
        %v362 = vshrl.u32 %v361, 7
        %v363 = vsub.s32 0, %v362
        %v364 = vrot.slane %v354, %v363
        %v365 = vmul.f32 %v329, %v360
        %v366 = vmul.f32 %v329, %v364
        %v367 = vmul.f32 %v334, %v360
        %v368 = vmul.f32 %v334, %v364
        %v369 = vmul.f32 %v339, %v360
        %v370 = vmul.f32 %v339, %v364
        %v371 = vmul.f32 %v344, %v360
        %v372 = vmul.f32 %v344, %v364
        %373 = vset.pattern.permute.xlu0 1
        %374 = vperm.xlu0 %373, %v322
        %v375 = vpop.permute.xlu0 %374
        %377 = vset.pattern.permute.xlu0 1
        %378 = vperm.xlu0 %377, %v323
        %v379 = vpop.permute.xlu0 %378
        %381 = vset.pattern.permute.xlu0 1
        %382 = vperm.xlu0 %381, %v324
        %v383 = vpop.permute.xlu0 %382
        %385 = vset.pattern.permute.xlu0 1
        %386 = vperm.xlu0 %385, %v325
        %v387 = vpop.permute.xlu0 %386
        %v389 = vlaneseq
        %v390 = vshrl.u32 %v389, 7
        %v391 = vsub.s32 1, %v390
        %v392 = vrot.slane %v321, %v391
        %v393 = vlaneseq
        %v394 = vshrl.u32 %v393, 7
        %v395 = vsub.s32 5, %v394
        %v396 = vrot.slane %v321, %v395
        %v399 = vlaneseq
        %v400 = vshrl.u32 %v399, 7
        %v401 = vsub.s32 1, %v400
        %v402 = vrot.slane %v392, %v401
        %v403 = vlaneseq
        %v404 = vshrl.u32 %v403, 7
        %v405 = vsub.s32 1, %v404
        %v406 = vrot.slane %v396, %v405
        %v407 = vmul.f32 %v375, %v402
        %v408 = vmul.f32 %v375, %v406
        %v409 = vmul.f32 %v379, %v402
        %v410 = vmul.f32 %v379, %v406
        %v411 = vmul.f32 %v383, %v402
        %v412 = vmul.f32 %v383, %v406
        %v413 = vmul.f32 %v387, %v402
        %v414 = vmul.f32 %v387, %v406
        %v415 = vadd.f32 %v365, %v407
        %v416 = vadd.f32 %v366, %v408
        %v417 = vadd.f32 %v367, %v409
        %v418 = vadd.f32 %v368, %v410
        %v419 = vadd.f32 %v369, %v411
        %v420 = vadd.f32 %v370, %v412
        %v421 = vadd.f32 %v371, %v413
        %v422 = vadd.f32 %v372, %v414
        %423 = vset.pattern.permute.xlu0 2
        %424 = vperm.xlu0 %423, %v322
        %v425 = vpop.permute.xlu0 %424
        %427 = vset.pattern.permute.xlu0 2
        %428 = vperm.xlu0 %427, %v323
        %v429 = vpop.permute.xlu0 %428
        %431 = vset.pattern.permute.xlu0 2
        %432 = vperm.xlu0 %431, %v324
        %v433 = vpop.permute.xlu0 %432
        %435 = vset.pattern.permute.xlu0 2
        %436 = vperm.xlu0 %435, %v325
        %v437 = vpop.permute.xlu0 %436
        %v439 = vlaneseq
        %v440 = vshrl.u32 %v439, 7
        %v441 = vsub.s32 2, %v440
        %v442 = vrot.slane %v321, %v441
        %v443 = vlaneseq
        %v444 = vshrl.u32 %v443, 7
        %v445 = vsub.s32 6, %v444
        %v446 = vrot.slane %v321, %v445
        %v449 = vlaneseq
        %v450 = vshrl.u32 %v449, 7
        %v451 = vsub.s32 2, %v450
        %v452 = vrot.slane %v442, %v451
        %v453 = vlaneseq
        %v454 = vshrl.u32 %v453, 7
        %v455 = vsub.s32 2, %v454
        %v456 = vrot.slane %v446, %v455
        %v457 = vmul.f32 %v425, %v452
        %v458 = vmul.f32 %v425, %v456
        %v459 = vmul.f32 %v429, %v452
        %v460 = vmul.f32 %v429, %v456
        %v461 = vmul.f32 %v433, %v452
        %v462 = vmul.f32 %v433, %v456
        %v463 = vmul.f32 %v437, %v452
        %v464 = vmul.f32 %v437, %v456
        %v465 = vadd.f32 %v415, %v457
        %v466 = vadd.f32 %v416, %v458
        %v467 = vadd.f32 %v417, %v459
        %v468 = vadd.f32 %v418, %v460
        %v469 = vadd.f32 %v419, %v461
        %v470 = vadd.f32 %v420, %v462
        %v471 = vadd.f32 %v421, %v463
        %v472 = vadd.f32 %v422, %v464
        %v473 = vld [vmem:[%s3] sm:$0xff]
        %v474 = vld [vmem:[%s3 + $0x8] sm:$0xff]
        %v475 = vld [vmem:[%s3 + $0x10] sm:$0xff]
        %v476 = vld [vmem:[%s3 + $0x18] sm:$0xff]
        %478 = vset.pattern.permute.xlu0 0
        %479 = vperm.xlu0 %478, %v473
        %v480 = vpop.permute.xlu0 %479
        %483 = vset.pattern.permute.xlu0 0
        %484 = vperm.xlu0 %483, %v474
        %v485 = vpop.permute.xlu0 %484
        %488 = vset.pattern.permute.xlu0 0
        %489 = vperm.xlu0 %488, %v475
        %v490 = vpop.permute.xlu0 %489
        %493 = vset.pattern.permute.xlu0 0
        %494 = vperm.xlu0 %493, %v476
        %v495 = vpop.permute.xlu0 %494
        %v497 = vadd.f32 %v465, %v480
        %v498 = vadd.f32 %v466, %v480
        %v499 = vadd.f32 %v467, %v485
        %v500 = vadd.f32 %v468, %v485
        %v501 = vadd.f32 %v469, %v490
        %v502 = vadd.f32 %v470, %v490
        %v503 = vadd.f32 %v471, %v495
        %v504 = vadd.f32 %v472, %v495
        %v505 = vtanh.pop %v497
        %v506 = vtanh.pop %v498
        %v507 = vtanh.pop %v499
        %v508 = vtanh.pop %v500
        %v509 = vtanh.pop %v501
        %v510 = vtanh.pop %v502
        %v511 = vtanh.pop %v503
        %v512 = vtanh.pop %v504
        %v513 = vld [vmem:[%s4] sm:$0x7]
        %v514 = vld [vmem:[%s5] sm:$0x7]
        %516 = vset.pattern.permute.xlu0 0
        %517 = vperm.xlu0 %516, %v514
        %v518 = vpop.permute.xlu0 %517
        %vm520 = vcmask 261120
        %v522 = vsel %vm520, %v513, 0
        %524 = vmatprep.subr.mxu0 %v506
        %525 = vmatpush1.msra.mxu0 %v505
        %526 = vmatprep.subr.mxu0 %v508
        %527 = vmatpush1.msra.mxu0 %v507
        %528 = vmatprep.subr.mxu0 %v510
        %529 = vmatpush1.msra.mxu0 %v509
        %530 = vmatprep.subr.mxu0 %v512
        %531 = vmatpush1.msra.mxu0 %v511
        %532 = vmatprep.subr.mxu0 0.0
        %533 = vmatpush1.msra.mxu0 0.0
        %534 = vmatprep.subr.mxu0 0.0
        %535 = vmatpush1.msra.mxu0 0.0
        %536 = vmatprep.subr.mxu0 0.0
        %537 = vmatpush1.msra.mxu0 0.0
        %538 = vmatprep.subr.mxu0 0.0
        %539 = vmatpush1.msra.mxu0 0.0
        %540 = vmatprep.subr.mxu0 0.0
        %541 = vmatpush1.msra.mxu0 0.0
        %542 = vmatprep.subr.mxu0 0.0
        %543 = vmatpush1.msra.mxu0 0.0
        %544 = vmatprep.subr.mxu0 0.0
        %545 = vmatpush1.msra.mxu0 0.0
        %546 = vmatprep.subr.mxu0 0.0
        %547 = vmatpush1.msra.mxu0 0.0
        %548 = vmatprep.subr.mxu0 0.0
        %549 = vmatpush1.msra.mxu0 0.0
        %550 = vmatprep.subr.mxu0 0.0
        %551 = vmatpush1.msra.mxu0 0.0
        %552 = vmatprep.subr.mxu0 0.0
        %553 = vmatpush1.msra.mxu0 0.0
        %554 = vmatprep.subr.mxu0 0.0
        %555 = vmatpush1.msra.mxu0 0.0
        %556 = vmatprep.subr.mxu0 0.0
        %557 = vmatpush1.msra.mxu0 0.0
        %558 = vmatprep.subr.mxu0 0.0
        %559 = vmatpush1.msra.mxu0 0.0
        %560 = vmatprep.subr.mxu0 0.0
        %561 = vmatpush1.msra.mxu0 0.0
        %562 = vmatprep.subr.mxu0 0.0
        %563 = vmatpush1.msra.mxu0 0.0
        %564 = vmatprep.subr.mxu0 0.0
        %565 = vmatpush1.msra.mxu0 0.0
        %566 = vmatprep.subr.mxu0 0.0
        %567 = vmatpush1.msra.mxu0 0.0
        %568 = vmatprep.subr.mxu0 0.0
        %569 = vmatpush1.msra.mxu0 0.0
        %570 = vmatprep.subr.mxu0 0.0
        %571 = vmatpush1.msra.mxu0 0.0
        %572 = vmatprep.subr.mxu0 0.0
        %573 = vmatpush1.msra.mxu0 0.0
        %574 = vmatprep.subr.mxu0 0.0
        %575 = vmatpush1.msra.mxu0 0.0
        %576 = vmatprep.subr.mxu0 0.0
        %577 = vmatpush1.msra.mxu0 0.0
        %578 = vmatprep.subr.mxu0 0.0
        %579 = vmatpush1.msra.mxu0 0.0
        %580 = vmatprep.subr.mxu0 0.0
        %581 = vmatpush1.msra.mxu0 0.0
        %582 = vmatprep.subr.mxu0 0.0
        %583 = vmatpush1.msra.mxu0 0.0
        %584 = vmatprep.subr.mxu0 0.0
        %585 = vmatpush1.msra.mxu0 0.0
        %586 = vmatprep.subr.mxu0 0.0
        %587 = vmatpush1.msra.mxu0 0.0
        %588 = vmatprep.mubr.f32.mxu0 0.0
        %589 = vmatmul.mubr.f32.gmra.mrb[0].mxu0 %v522
        %v590 = vpop.f32.mrb[0].mxu0
        %v591 = vadd.f32 %v518, %v590
        %v592 = vpop.f32.mrb[0].mxu0
        %v593 = vadd.f32 %v518, %v592
        %594 = vdwg.mxu0
        %v597 = vcombine.low %v591, %v593
        %599 = vst [vmem:[%s305] sm:$0x77] %v597
        %v600 = vld [vmem:[%s6] sm:$0xff]
        %v601 = vld [vmem:[%s6 + $0x8] sm:$0xff]
        %v602 = vld [vmem:[%s6 + $0x10] sm:$0xff]
        %v603 = vld [vmem:[%s6 + $0x18] sm:$0xff]
        %v604 = vmul.f32 %v505, %v505
        %v605 = vmul.f32 %v506, %v506
        %v606 = vmul.f32 %v507, %v507
        %v607 = vmul.f32 %v508, %v508
        %v608 = vmul.f32 %v509, %v509
        %v609 = vmul.f32 %v510, %v510
        %v610 = vmul.f32 %v511, %v511
        %v611 = vmul.f32 %v512, %v512
        %613 = vset.pattern.permute.xlu0 0
        %614 = vperm.xlu0 %613, %v600
        %v615 = vpop.permute.xlu0 %614
        %618 = vset.pattern.permute.xlu0 0
        %619 = vperm.xlu0 %618, %v601
        %v620 = vpop.permute.xlu0 %619
        %623 = vset.pattern.permute.xlu0 0
        %624 = vperm.xlu0 %623, %v602
        %v625 = vpop.permute.xlu0 %624
        %628 = vset.pattern.permute.xlu0 0
        %629 = vperm.xlu0 %628, %v603
        %v630 = vpop.permute.xlu0 %629
        %v632 = vmul.f32 %v615, %v604
        %v633 = vmul.f32 %v615, %v605
        %v634 = vmul.f32 %v620, %v606
        %v635 = vmul.f32 %v620, %v607
        %v636 = vmul.f32 %v625, %v608
        %v637 = vmul.f32 %v625, %v609
        %v638 = vmul.f32 %v630, %v610
        %v639 = vmul.f32 %v630, %v611
        %v640 = vadd.f32 %v632, %v634
        %v641 = vadd.f32 %v640, %v636
        %v642 = vadd.f32 %v641, %v638
        %v643 = vrot.slane %v642, 4
        %v644 = vadd.f32 %v642, %v643
        %v645 = vrot.slane %v644, 2
        %v646 = vadd.f32 %v644, %v645
        %v647 = vrot.slane %v646, 1
        %v648 = vadd.f32 %v646, %v647
        %v649 = vadd.f32 %v633, %v635
        %v650 = vadd.f32 %v649, %v637
        %v651 = vadd.f32 %v650, %v639
        %v652 = vrot.slane %v651, 4
        %v653 = vadd.f32 %v651, %v652
        %v654 = vrot.slane %v653, 2
        %v655 = vadd.f32 %v653, %v654
        %v656 = vrot.slane %v655, 1
        %v657 = vadd.f32 %v655, %v656
        %v658 = vld [vmem:[#allocation2] sm:$0x1]
        %660 = vset.pattern.permute.xlu0 0
        %661 = vperm.xlu0 %660, %v658
        %v662 = vpop.permute.xlu0 %661
        %v664 = vlaneseq
        %v665 = vshrl.u32 %v664, 7
        %v666 = vsub.s32 0, %v665
        %v667 = vrot.slane %v662, %v666
        %v668 = vsub.f32 %v648, %v667
        %v669 = vsub.f32 %v657, %v667
        %v672 = vcombine.low %v668, %v669
        %v674 = vunpack.c.l.s4 1966171168
        %v675 = vunpack.c.0.s8 %v674
        %v676 = vlaneseq
        %v677 = vshrl.u32 %v676, 7
        %v678 = vsub.s32 %v675, %v677
        %v679 = vrot.slane %v672, %v678
        %v681 = vunpack.c.l.s4 1966171168
        %v682 = vunpack.c.0.s8 %v681
        %v683 = vlaneseq
        %v684 = vshrl.u32 %v683, 7
        %v685 = vsub.s32 %v682, %v684
        %v686 = vrot.slane %v679, %v685
        %v688 = vlaneseq
        %vm689 = vcmp.ge.s32.totalorder %v688, 0
        %vm690 = vcmp.lt.s32.totalorder %v688, 256
        %vm691 = vmand %vm689, %vm690
        %692 = vst.msk [vmem:[%s312] sm:$0x3] %vm691, %v686
        %s693 = sand.u32 %s188, 1
        %s694 = scalar_lea.sflag [#allocation4], %s693
        %s695 = sand.u32 %s188, 1
        %s696 = smul.addr %s695, 8
        %s697 = scalar_lea.vmem [#allocation3], %s696
        %s698 = sand.u32 %s214, 1
        %s699 = scalar_lea.sflag [#allocation6], %s698
        %s700 = sand.u32 %s214, 1
        %s701 = smul.addr %s700, 2
        %s702 = scalar_lea.vmem [#allocation5], %s701
        // Predicated region
        $region49: #{tpu_custom_call.1} parent=47 // pred_check
          %p703 = pneg %p198
        $region50: #{tpu_custom_call.1} parent=47 // pred_check_branch
          %705 = sbr.rel (%p703) target = $region52
        $region51: #{tpu_custom_call.1} parent=47 // pred_region
          %s706 = smul.u32 2, %s28
          %s708 = ssub.s32 128, 128
          %709 = vsyncadd %s694, %s708
          %s710 = smul.addr %s706, 64
          %s711 = scalar_lea.hbm %s7, %s710
          %s713 = sshll.u32 %s697, 4
          %s714 = int_to_ptr.vmem [resolvable:$true] %s713
          %716 = dma.vmem_to_hbm [thread:$0]  %s714, 128, %s711, %s694
        $region52: #{tpu_custom_call.1} parent=47 // pred_fallthru
          _
        // Predicated region
        $region53: #{tpu_custom_call.1} parent=47 // pred_check
          %p717 = pneg %p224
        $region54: #{tpu_custom_call.1} parent=47 // pred_check_branch
          %719 = sbr.rel (%p717) target = $region56
        $region55: #{tpu_custom_call.1} parent=47 // pred_region
          %s720 = smul.u32 2, %s28
          %s722 = ssub.s32 32, 32
          %723 = vsyncadd %s699, %s722
          %s724 = smul.addr %s720, 16
          %s725 = scalar_lea.hbm %s8, %s724
          %s727 = sshll.u32 %s702, 4
          %s728 = int_to_ptr.vmem [resolvable:$true] %s727
          %730 = dma.vmem_to_hbm [thread:$0]  %s728, 32, %s725, %s699
        $region56: #{tpu_custom_call.1} parent=47 // pred_fallthru
          _
      $region48: #{tpu_custom_call.1} parent=5 // pred_fallthru
        _
      %p731 = scmp.le.s32.totalorder 2, %s23
      // Predicated region
      $region57: #{tpu_custom_call.1} parent=5 // pred_check
        %p732 = pneg %p731
      $region58: #{tpu_custom_call.1} parent=5 // pred_check_branch
        %734 = sbr.rel (%p732) target = $region60
      $region59: #{tpu_custom_call.1} parent=5 // pred_region
        %s735 = ssub.s32 %s23, 2
        // Predicated region
        $region61: #{tpu_custom_call.1} parent=59 // pred_check
          %p736 = pneg %p204
        $region62: #{tpu_custom_call.1} parent=59 // pred_check_branch
          %738 = sbr.rel (%p736) target = $region64
        $region63: #{tpu_custom_call.1} parent=59 // pred_region
          %s739 = sand.u32 %s189, 1
          %s740 = scalar_lea.sflag [#allocation4], %s739
          %s741 = sand.u32 %s189, 1
          %s742 = smul.addr %s741, 8
          %s743 = scalar_lea.vmem [#allocation3], %s742
          %744 = dma.done %s740, 128
        $region64: #{tpu_custom_call.1} parent=59 // pred_fallthru
          _
        // Predicated region
        $region65: #{tpu_custom_call.1} parent=59 // pred_check
          %p745 = pneg %p230
        $region66: #{tpu_custom_call.1} parent=59 // pred_check_branch
          %747 = sbr.rel (%p745) target = $region68
        $region67: #{tpu_custom_call.1} parent=59 // pred_region
          %s748 = sand.u32 %s215, 1
          %s749 = scalar_lea.sflag [#allocation6], %s748
          %s750 = sand.u32 %s215, 1
          %s751 = smul.addr %s750, 2
          %s752 = scalar_lea.vmem [#allocation5], %s751
          %753 = dma.done %s749, 32
        $region68: #{tpu_custom_call.1} parent=59 // pred_fallthru
          _
      $region60: #{tpu_custom_call.1} parent=5 // pred_fallthru
        _
    $region6: #{tpu_custom_call.1} parent=1 // loop_footer
      %s27 = sadd.s32 1, %s23
    $region7: #{tpu_custom_call.1} parent=1 // loop_footer_branch
      %22 = sbr.rel target = $region3
    $region8: #{tpu_custom_call.1} parent=1 // loop_exit
      _
    %754 = vsyncpa [#allocation4], 1
    %s755 = scalar_lea.sflag [#allocation4], 1
    %756 = vsyncpa %s755, 1
    %757 = vsyncpa [#allocation6], 1
    %s758 = scalar_lea.sflag [#allocation6], 1
    %759 = vsyncpa %s758, 1

</llo_original>
